<compile_context>
chip_gen: v5e
topology: v5e:2x2
jax: 0.10.0
libtpu: 0.0.40
codegen_flags: <defaults>
</compile_context>

<pallas_src>
import functools

import jax
import jax.numpy as jnp
from jax.experimental import pallas as pl
from jax.experimental.pallas import tpu as pltpu


# --------------------------------------------------------------------------
# Kernel
# --------------------------------------------------------------------------
def _ls_ce_kernel(logits_ref, second_ref, diag_ref, rowloss_ref,
                  m_ref, l_ref, s_ref, t_ref, *,
                  batch_size, num_classes, tile_b, tile_c, inv_cm1,
                  use_labels, mask_rows, mask_cols):
    """One (batch_tile, class_tile) step of the smoothed soft-target CE."""
    i = pl.program_id(0)            # batch tile
    k = pl.program_id(1)            # class tile (reduction axis, innermost)

    @pl.when(k == 0)
    def _init():
        m_ref[...] = jnp.full_like(m_ref, -jnp.inf)
        l_ref[...] = jnp.zeros_like(l_ref)
        # Label path: S = (1 - d[y]) + inv_cm1 * sum_c d  -> seed the "+1" once.
        s_ref[...] = jnp.full_like(s_ref, 1.0 if use_labels else 0.0)
        t_ref[...] = jnp.zeros_like(t_ref)

    x = logits_ref[...].astype(jnp.float32)     # [TB, TC] logits (f32 in-reg)
    d = diag_ref[...].astype(jnp.float32)       # [1,  TC] smoothing diagonal

    col_ids = None
    col_ok = None
    if mask_cols or use_labels:
        col_ids = k * tile_c + jax.lax.broadcasted_iota(jnp.int32, (1, tile_c), 1)
    if mask_cols:
        # Ragged last class tile: padded columns hold undefined data.
        # Keep these SELECTS (never mask-multiply) so NaN/Inf cannot leak.
        col_ok = col_ids < num_classes
        x = jnp.where(col_ok, x, -1e30)
        d = jnp.where(col_ok, d, 0.0)

    # ---- online log-sum-exp over class tiles --------------------------------
    m_old = m_ref[...]
    m_new = jnp.maximum(m_old, jnp.max(x, axis=-1, keepdims=True))
    l_ref[...] = (l_ref[...] * jnp.exp(m_old - m_new)
                  + jnp.sum(jnp.exp(x - m_new), axis=-1, keepdims=True))
    m_ref[...] = m_new

    # ---- running sums for  per_row = lse * S - T ----------------------------
    #   S = sum_c smoothed ,  T = sum_c smoothed * x
    if use_labels:
        y = second_ref[...]                              # [TB, 1] int32 labels
        picked = col_ids == y                            # [TB, TC]
        dsum_k = jnp.sum(d, axis=-1, keepdims=True)      # [1, 1]
        s_ref[...] += (inv_cm1 * dsum_k
                       - jnp.sum(jnp.where(picked, d, 0.0),
                                 axis=-1, keepdims=True))
        t_ref[...] += (inv_cm1 * jnp.sum(d * x, axis=-1, keepdims=True)
                       + jnp.sum(jnp.where(picked, (1.0 - d) * x, 0.0),
                                 axis=-1, keepdims=True))
    else:
        tgt = second_ref[...].astype(jnp.float32)        # [TB, TC] target probs
        smoothed = (1.0 - d) * tgt + d * inv_cm1
        if mask_cols:
            smoothed = jnp.where(col_ok, smoothed, 0.0)
        s_ref[...] += jnp.sum(smoothed, axis=-1, keepdims=True)
        t_ref[...] += jnp.sum(smoothed * x, axis=-1, keepdims=True)

    @pl.when(k == pl.num_programs(1) - 1)
    def _finalize():
        lse = m_ref[...] + jnp.log(l_ref[...])
        per_row = lse * s_ref[...] - t_ref[...]          # [TB, 1]
        if mask_rows:
            row_ids = i * tile_b + jax.lax.broadcasted_iota(
                jnp.int32, (tile_b, 1), 0)
            per_row = jnp.where(row_ids < batch_size, per_row, 0.0)   # select
        rowloss_ref[...] = per_row


# --------------------------------------------------------------------------
# Tiling / VMEM budgeting (generation-aware)
# --------------------------------------------------------------------------
def _round_up(x, m):
    return ((x + m - 1) // m) * m


def _vmem_capacity_bytes():
    try:
        cap = getattr(pltpu.get_tpu_info(), "vmem_capacity_bytes", None)
        if cap:
            return int(cap)
    except Exception:
        pass
    return 64 * 1024 * 1024   # conservative default: v7x per-TensorCore VMEM


def _choose_tiles(b, c, in_itemsize):
    cap = _vmem_capacity_bytes()
    budget = int(cap * 0.35)          # what we let the blocks + temps use
    vmem_limit = int(cap * 0.70)      # scoped-VMEM limit handed to Mosaic

    # Class tile: lane-dense multiple of 128, never larger than C, capped so
    # big-vocab inputs still pipeline (2048 is a multiple of 512 lanes).
    tc = 128 * min(max(c // 128, 1), 16)

    # Row alignment follows native sublane packing of the streamed dtype.
    row_align = {4: 8, 2: 16, 1: 32}.get(in_itemsize, 8)

    # Per row: 2 streamed inputs x 2 pipeline buffers (native dtype)
    # + ~5 live f32 [TB, TC] temporaries (x, tgt, smoothed, exp, product).
    bytes_per_row = tc * (4 * in_itemsize + 20)
    tb = budget // max(bytes_per_row, 1)
    tb = max(row_align, min(2048, (tb // row_align) * row_align))
    tb = min(tb, _round_up(b, row_align))

    # Keep >= 2 batch tiles when possible so "parallel" can shard across v7x's
    # two TensorCores (harmless extra grid step on single-TC chips).
    if tb >= b and b > row_align:
        tb = _round_up(pl.cdiv(b, 2), row_align)

    return tb, tc, vmem_limit


# --------------------------------------------------------------------------
# pallas_call launcher
# --------------------------------------------------------------------------
def _launch(logits, second, diag_row, *, use_labels, batch, classes):
    tb, tc, vmem_limit = _choose_tiles(
        batch, classes, jnp.dtype(logits.dtype).itemsize)
    nbt = pl.cdiv(batch, tb)
    nct = pl.cdiv(classes, tc)
    inv_cm1 = (1.0 / (classes - 1)) if classes > 1 else 0.0   # guard C == 1

    kernel = functools.partial(
        _ls_ce_kernel,
        batch_size=batch, num_classes=classes,
        tile_b=tb, tile_c=tc, inv_cm1=inv_cm1,
        use_labels=use_labels,
        mask_rows=(batch % tb != 0),
        mask_cols=(classes % tc != 0),
    )

    if use_labels:
        second_spec = pl.BlockSpec((tb, 1), lambda i, k: (i, 0))   # labels col
    else:
        second_spec = pl.BlockSpec((tb, tc), lambda i, k: (i, k))  # target tile

    # TODO(synk): on v5e, if a trace shows exposed DMA at small TB / huge C,
    # set pipeline_mode=pl.Buffered(3) on the two streamed input specs.
    per_row = pl.pallas_call(
        kernel,
        out_shape=jax.ShapeDtypeStruct((nbt * tb, 1), jnp.float32),
        grid_spec=pltpu.PrefetchScalarGridSpec(
            num_scalar_prefetch=0,
            grid=(nbt, nct),
            in_specs=[
                pl.BlockSpec((tb, tc), lambda i, k: (i, k)),   # logits tile
                second_spec,                                   # target / labels
                pl.BlockSpec((1, tc), lambda i, k: (0, k)),    # smoothing diag
            ],
            out_specs=pl.BlockSpec((tb, 1), lambda i, k: (i, 0)),
            scratch_shapes=[pltpu.VMEM((tb, 1), jnp.float32)] * 4,  # m, l, S, T
        ),
        compiler_params=pltpu.CompilerParams(
            dimension_semantics=("parallel", "arbitrary"),
            vmem_limit_bytes=vmem_limit,
        ),
    )(logits, second, diag_row)

    # Mean over the GLOBAL batch (padded rows were written as 0).
    return jnp.sum(per_row) * (1.0 / batch)


# --------------------------------------------------------------------------
# Public wrappers
# --------------------------------------------------------------------------
def _xla_fallback_dense(output, target, diag, c):
    inv_cm1 = (1.0 / (c - 1)) if c > 1 else 0.0
    smoothed = ((1.0 - diag)[None, :] * target.astype(jnp.float32)
                + diag[None, :] * inv_cm1)
    logp = jax.nn.log_softmax(output.astype(jnp.float32), axis=-1)
    return jnp.mean(-jnp.sum(smoothed * logp, axis=-1))


def dynamic_label_smoothing_ce(output, target, smoothing_matrix):
    """output: [B, C] logits, target: [B, C] probabilities -> scalar loss."""
    b, c = output.shape
    diag = jnp.diagonal(smoothing_matrix).astype(jnp.float32)
    if c < 128:
        # Tiny class axis: a Pallas tile would waste 7/8+ of every lane.
        return _xla_fallback_dense(output, target, diag, c)
    return _launch(output, target, diag.reshape(1, c),
                   use_labels=False, batch=b, classes=c)


def dynamic_label_smoothing_ce_from_labels(output, labels, smoothing_matrix):
    """Hard-label fast path: no dense one-hot target is ever streamed."""
    b, c = output.shape
    diag = jnp.diagonal(smoothing_matrix).astype(jnp.float32)
    if c < 128:
        tgt = jax.nn.one_hot(labels, c, dtype=jnp.float32)
        return _xla_fallback_dense(output, tgt, diag, c)
    lab = labels.astype(jnp.int32).reshape(b, 1)
    return _launch(output, lab, diag.reshape(1, c),
                   use_labels=True, batch=b, classes=c)


# --------------------------------------------------------------------------
# Reference (literal vectorization of the PyTorch module)
# --------------------------------------------------------------------------
def _reference(output, target, smoothing_matrix):
    c = output.shape[-1]
    diag = jnp.diagonal(smoothing_matrix).astype(jnp.float32)
    smoothed = ((1.0 - diag)[None, :] * target.astype(jnp.float32)
                + diag[None, :] / (c - 1))
    logp = jax.nn.log_softmax(output.astype(jnp.float32), axis=-1)
    return jnp.mean(-jnp.sum(smoothed * logp, axis=-1))


# --------------------------------------------------------------------------
# Self-test
# --------------------------------------------------------------------------
if __name__ == "__main__":
    key = jax.random.PRNGKey(0)
    ks = jax.random.split(key, 8)

    def make_case(kq, kl, km, b, c, dtype=jnp.float32):
        logits = jax.random.normal(kq, (b, c), dtype=jnp.float32).astype(dtype)
        labels = jax.random.randint(kl, (b,), 0, c)
        target = jax.nn.one_hot(labels, c, dtype=dtype)
        smooth = 0.2 * jax.random.uniform(km, (c, c), dtype=jnp.float32)
        return logits, labels, target, smooth

    # Case 1: wide-C dense-target path (class tiling + 2 batch tiles + ragged batch).
    logits, labels, target, sm = make_case(ks[0], ks[1], ks[2], b=24, c=256)
    got = jax.block_until_ready(dynamic_label_smoothing_ce(logits, target, sm))
    ref = _reference(logits, target, sm)
    assert jnp.allclose(got, ref, atol=1e-4, rtol=1e-4), (got, ref)

    # Case 2: sparse-label fast path (no dense one-hot streamed from HBM).
    got2 = jax.block_until_ready(
        dynamic_label_smoothing_ce_from_labels(logits, labels, sm))
    assert jnp.allclose(got2, ref, atol=1e-4, rtol=1e-4), (got2, ref)

    # Case 3: ragged batch AND ragged class tile (B=10, C=200 -> col masking).
    logits3, labels3, target3, sm3 = make_case(ks[3], ks[4], ks[5], b=10, c=200)
    ref3 = _reference(logits3, target3, sm3)
    got3 = jax.block_until_ready(dynamic_label_smoothing_ce(logits3, target3, sm3))
    assert jnp.allclose(got3, ref3, atol=1e-4, rtol=1e-4), (got3, ref3)
    got3b = jax.block_until_ready(
        dynamic_label_smoothing_ce_from_labels(logits3, labels3, sm3))
    assert jnp.allclose(got3b, ref3, atol=1e-4, rtol=1e-4), (got3b, ref3)

    # Case 4: bf16 inputs streamed in native dtype (both sides see the same
    # bf16-rounded data; only reduction order differs).
    lb, tb_ = logits.astype(jnp.bfloat16), target.astype(jnp.bfloat16)
    got4 = jax.block_until_ready(dynamic_label_smoothing_ce(lb, tb_, sm))
    ref4 = _reference(lb, tb_, sm)
    assert jnp.allclose(got4, ref4, atol=2e-3, rtol=2e-3), (got4, ref4)

    # Case 5: tiny C -> plain-XLA fallback path.
    logits5, labels5, target5, sm5 = make_case(ks[6], ks[7], ks[2], b=8, c=16)
    got5 = jax.block_until_ready(dynamic_label_smoothing_ce(logits5, target5, sm5))
    ref5 = _reference(logits5, target5, sm5)
    assert jnp.allclose(got5, ref5, atol=1e-5, rtol=1e-5), (got5, ref5)

    print("KERNEL_OK")
</pallas_src>

<mosaic_0001>
module attributes {stable_mosaic.version = 11 : i64} {
  func.func @_ls_ce_kernel(%arg0: i32, %arg1: i32, %arg2: memref<16x256xf32, #tpu.memory_space<vmem>>, %arg3: memref<16x256xf32, #tpu.memory_space<vmem>>, %arg4: memref<1x256xf32, #tpu.memory_space<vmem>>, %arg5: memref<16x1xf32, #tpu.memory_space<vmem>>, %arg6: memref<16x1xf32, #tpu.memory_space<vmem>>, %arg7: memref<16x1xf32, #tpu.memory_space<vmem>>, %arg8: memref<16x1xf32, #tpu.memory_space<vmem>>, %arg9: memref<16x1xf32, #tpu.memory_space<vmem>>) attributes {dimension_semantics = [#tpu.dimension_semantics<parallel>, #tpu.dimension_semantics<arbitrary>], iteration_bounds = array<i64: 2, 1>, scalar_prefetch = 0 : i64, scratch_operands = 4 : i64, tpu.core_type = #tpu.core_type<tc>, window_params = [{transform_indices = @transform_0, window_bounds = array<i64: 16, 256>}, {transform_indices = @transform_1, window_bounds = array<i64: 16, 256>}, {transform_indices = @transform_2, window_bounds = array<i64: 1, 256>}, {transform_indices = @transform_3, window_bounds = array<i64: 16, 1>}]} {
    %c0_i32 = arith.constant 0 : i32
    %0 = arith.cmpi eq, %arg1, %c0_i32 : i32
    %1 = arith.extui %0 : i1 to i32
    %c0_i32_0 = arith.constant 0 : i32
    %2 = arith.cmpi ne, %1, %c0_i32_0 : i32
    scf.if %2 {
      %cst_29 = arith.constant 0xFF800000 : f32
      %44 = vector.broadcast %cst_29 : f32 to vector<16x1xf32>
      %c0_30 = arith.constant 0 : index
      %c0_31 = arith.constant 0 : index
      %45 = vector.load %arg6[%c0_30, %c0_31] : memref<16x1xf32, #tpu.memory_space<vmem>>, vector<16x1xf32>
      tpu.vector_store %arg6[%c0_30, %c0_31], %44 {strides = array<i32>} : memref<16x1xf32, #tpu.memory_space<vmem>>, vector<16x1xf32>,
      %cst_32 = arith.constant 0.000000e+00 : f32
      %46 = vector.broadcast %cst_32 : f32 to vector<16x1xf32>
      %c0_33 = arith.constant 0 : index
      %c0_34 = arith.constant 0 : index
      %47 = vector.load %arg7[%c0_33, %c0_34] : memref<16x1xf32, #tpu.memory_space<vmem>>, vector<16x1xf32>
      tpu.vector_store %arg7[%c0_33, %c0_34], %46 {strides = array<i32>} : memref<16x1xf32, #tpu.memory_space<vmem>>, vector<16x1xf32>,
      %cst_35 = arith.constant 0.000000e+00 : f32
      %48 = vector.broadcast %cst_35 : f32 to vector<16x1xf32>
      %c0_36 = arith.constant 0 : index
      %c0_37 = arith.constant 0 : index
      %49 = vector.load %arg8[%c0_36, %c0_37] : memref<16x1xf32, #tpu.memory_space<vmem>>, vector<16x1xf32>
      tpu.vector_store %arg8[%c0_36, %c0_37], %48 {strides = array<i32>} : memref<16x1xf32, #tpu.memory_space<vmem>>, vector<16x1xf32>,
      %cst_38 = arith.constant 0.000000e+00 : f32
      %50 = vector.broadcast %cst_38 : f32 to vector<16x1xf32>
      %c0_39 = arith.constant 0 : index
      %c0_40 = arith.constant 0 : index
      %51 = vector.load %arg9[%c0_39, %c0_40] : memref<16x1xf32, #tpu.memory_space<vmem>>, vector<16x1xf32>
      tpu.vector_store %arg9[%c0_39, %c0_40], %50 {strides = array<i32>} : memref<16x1xf32, #tpu.memory_space<vmem>>, vector<16x1xf32>,
    } else {
    }
    %c0 = arith.constant 0 : index
    %c0_1 = arith.constant 0 : index
    %3 = vector.load %arg2[%c0, %c0_1] : memref<16x256xf32, #tpu.memory_space<vmem>>, vector<16x256xf32>
    %c0_2 = arith.constant 0 : index
    %c0_3 = arith.constant 0 : index
    %4 = vector.load %arg4[%c0_2, %c0_3] : memref<1x256xf32, #tpu.memory_space<vmem>>, vector<1x256xf32>
    %c0_4 = arith.constant 0 : index
    %c0_5 = arith.constant 0 : index
    %5 = vector.load %arg6[%c0_4, %c0_5] : memref<16x1xf32, #tpu.memory_space<vmem>>, vector<16x1xf32>
    %cst = arith.constant dense<0xFF800000> : vector<16xf32>
    %6 = vector.multi_reduction <maximumf>, %3, %cst [1] : vector<16x256xf32> to vector<16xf32>
    %7 = vector.shape_cast %6 : vector<16xf32> to vector<16x1xf32>
    %8 = arith.maximumf %5, %7 : vector<16x1xf32>
    %c0_6 = arith.constant 0 : index
    %c0_7 = arith.constant 0 : index
    %9 = vector.load %arg7[%c0_6, %c0_7] : memref<16x1xf32, #tpu.memory_space<vmem>>, vector<16x1xf32>
    %10 = arith.subf %5, %8 : vector<16x1xf32>
    %11 = math.exp %10 : vector<16x1xf32>
    %12 = arith.mulf %9, %11 : vector<16x1xf32>
    %13 = vector.broadcast %8 : vector<16x1xf32> to vector<16x256xf32>
    %14 = arith.subf %3, %13 : vector<16x256xf32>
    %15 = math.exp %14 : vector<16x256xf32>
    %cst_8 = arith.constant dense<0.000000e+00> : vector<16xf32>
    %16 = vector.multi_reduction <add>, %15, %cst_8 [1] : vector<16x256xf32> to vector<16xf32>
    %17 = vector.shape_cast %16 : vector<16xf32> to vector<16x1xf32>
    %18 = arith.addf %12, %17 : vector<16x1xf32>
    %c0_9 = arith.constant 0 : index
    %c0_10 = arith.constant 0 : index
    %19 = vector.load %arg7[%c0_9, %c0_10] : memref<16x1xf32, #tpu.memory_space<vmem>>, vector<16x1xf32>
    tpu.vector_store %arg7[%c0_9, %c0_10], %18 {strides = array<i32>} : memref<16x1xf32, #tpu.memory_space<vmem>>, vector<16x1xf32>,
    %c0_11 = arith.constant 0 : index
    %c0_12 = arith.constant 0 : index
    %20 = vector.load %arg6[%c0_11, %c0_12] : memref<16x1xf32, #tpu.memory_space<vmem>>, vector<16x1xf32>
    tpu.vector_store %arg6[%c0_11, %c0_12], %8 {strides = array<i32>} : memref<16x1xf32, #tpu.memory_space<vmem>>, vector<16x1xf32>,
    %c0_13 = arith.constant 0 : index
    %c0_14 = arith.constant 0 : index
    %21 = vector.load %arg3[%c0_13, %c0_14] : memref<16x256xf32, #tpu.memory_space<vmem>>, vector<16x256xf32>
    %cst_15 = arith.constant 1.000000e+00 : f32
    %22 = vector.broadcast %cst_15 : f32 to vector<1x256xf32>
    %23 = arith.subf %22, %4 : vector<1x256xf32>
    %24 = vector.broadcast %23 : vector<1x256xf32> to vector<16x256xf32>
    %25 = arith.mulf %24, %21 : vector<16x256xf32>
    %cst_16 = arith.constant 0.00392156886 : f32
    %26 = vector.broadcast %cst_16 : f32 to vector<1x256xf32>
    %27 = arith.mulf %4, %26 : vector<1x256xf32>
    %28 = vector.broadcast %27 : vector<1x256xf32> to vector<16x256xf32>
    %29 = arith.addf %25, %28 : vector<16x256xf32>
    %c0_17 = arith.constant 0 : index
    %c0_18 = arith.constant 0 : index
    %30 = vector.load %arg8[%c0_17, %c0_18] : memref<16x1xf32, #tpu.memory_space<vmem>>, vector<16x1xf32>
    %cst_19 = arith.constant dense<0.000000e+00> : vector<16xf32>
    %31 = vector.multi_reduction <add>, %29, %cst_19 [1] : vector<16x256xf32> to vector<16xf32>
    %32 = vector.shape_cast %31 : vector<16xf32> to vector<16x1xf32>
    %33 = arith.addf %30, %32 : vector<16x1xf32>
    %c0_20 = arith.constant 0 : index
    %c0_21 = arith.constant 0 : index
    %34 = vector.load %arg8[%c0_20, %c0_21] : memref<16x1xf32, #tpu.memory_space<vmem>>, vector<16x1xf32>
    tpu.vector_store %arg8[%c0_20, %c0_21], %33 {strides = array<i32>} : memref<16x1xf32, #tpu.memory_space<vmem>>, vector<16x1xf32>,
    %c0_22 = arith.constant 0 : index
    %c0_23 = arith.constant 0 : index
    %35 = vector.load %arg9[%c0_22, %c0_23] : memref<16x1xf32, #tpu.memory_space<vmem>>, vector<16x1xf32>
    %36 = arith.mulf %29, %3 : vector<16x256xf32>
    %cst_24 = arith.constant dense<0.000000e+00> : vector<16xf32>
    %37 = vector.multi_reduction <add>, %36, %cst_24 [1] : vector<16x256xf32> to vector<16xf32>
    %38 = vector.shape_cast %37 : vector<16xf32> to vector<16x1xf32>
    %39 = arith.addf %35, %38 : vector<16x1xf32>
    %c0_25 = arith.constant 0 : index
    %c0_26 = arith.constant 0 : index
    %40 = vector.load %arg9[%c0_25, %c0_26] : memref<16x1xf32, #tpu.memory_space<vmem>>, vector<16x1xf32>
    tpu.vector_store %arg9[%c0_25, %c0_26], %39 {strides = array<i32>} : memref<16x1xf32, #tpu.memory_space<vmem>>, vector<16x1xf32>,
    %c0_i32_27 = arith.constant 0 : i32
    %41 = arith.cmpi eq, %arg1, %c0_i32_27 : i32
    %42 = arith.extui %41 : i1 to i32
    %c0_i32_28 = arith.constant 0 : i32
    %43 = arith.cmpi ne, %42, %c0_i32_28 : i32
    scf.if %43 {
      %c0_29 = arith.constant 0 : index
      %c0_30 = arith.constant 0 : index
      %44 = vector.load %arg6[%c0_29, %c0_30] : memref<16x1xf32, #tpu.memory_space<vmem>>, vector<16x1xf32>
      %c0_31 = arith.constant 0 : index
      %c0_32 = arith.constant 0 : index
      %45 = vector.load %arg7[%c0_31, %c0_32] : memref<16x1xf32, #tpu.memory_space<vmem>>, vector<16x1xf32>
      %46 = math.log %45 : vector<16x1xf32>
      %47 = arith.addf %44, %46 : vector<16x1xf32>
      %c0_33 = arith.constant 0 : index
      %c0_34 = arith.constant 0 : index
      %48 = vector.load %arg8[%c0_33, %c0_34] : memref<16x1xf32, #tpu.memory_space<vmem>>, vector<16x1xf32>
      %49 = arith.mulf %47, %48 : vector<16x1xf32>
      %c0_35 = arith.constant 0 : index
      %c0_36 = arith.constant 0 : index
      %50 = vector.load %arg9[%c0_35, %c0_36] : memref<16x1xf32, #tpu.memory_space<vmem>>, vector<16x1xf32>
      %51 = arith.subf %49, %50 : vector<16x1xf32>
      %c16_i32 = arith.constant 16 : i32
      %52 = arith.muli %arg0, %c16_i32 : i32
      %53 = tpu.iota {dimensions = array<i32: 0>} : vector<16x1xi32>
      %54 = vector.broadcast %52 : i32 to vector<16x1xi32>
      %55 = arith.addi %54, %53 : vector<16x1xi32>
      %c24_i32 = arith.constant 24 : i32
      %56 = vector.broadcast %c24_i32 : i32 to vector<16x1xi32>
      %57 = arith.cmpi slt, %55, %56 : vector<16x1xi32>
      %cst_37 = arith.constant 0.000000e+00 : f32
      %58 = vector.broadcast %cst_37 : f32 to vector<16x1xf32>
      %59 = arith.select %57, %51, %58 : vector<16x1xi1>, vector<16x1xf32>
      %c0_38 = arith.constant 0 : index
      %c0_39 = arith.constant 0 : index
      %60 = vector.load %arg5[%c0_38, %c0_39] : memref<16x1xf32, #tpu.memory_space<vmem>>, vector<16x1xf32>
      tpu.vector_store %arg5[%c0_38, %c0_39], %59 {strides = array<i32>} : memref<16x1xf32, #tpu.memory_space<vmem>>, vector<16x1xf32>,
    } else {
    }
    return
  }
  func.func @transform_0(%arg0: i32, %arg1: i32) -> (i32, i32) {
    %c0_i32 = arith.constant 0 : i32
    return %arg0, %arg1 : i32, i32
  }
  func.func @transform_1(%arg0: i32, %arg1: i32) -> (i32, i32) {
    %c0_i32 = arith.constant 0 : i32
    return %arg0, %arg1 : i32, i32
  }
  func.func @transform_2(%arg0: i32, %arg1: i32) -> (i32, i32) {
    %c0_i32 = arith.constant 0 : i32
    %c0_i32_0 = arith.constant 0 : i32
    return %c0_i32, %arg1 : i32, i32
  }
  func.func @transform_3(%arg0: i32, %arg1: i32) -> (i32, i32) {
    %c0_i32 = arith.constant 0 : i32
    %c0_i32_0 = arith.constant 0 : i32
    return %arg0, %c0_i32 : i32, i32
  }
}

</mosaic_0001>

<llo_original>
// kernel: tpu_custom_call.1
$region0: #{tpu_custom_call.1}
  #allocation0 [shape = 'u32[]', space=smem, size = 0x4, offset = 0x4, fixed_abs, tag = 'smem constant byte address 0x4 - core index']
  #allocation1 [shape = 'u32[72,128]{1,0:T(1,128)}', space=vmem, size = 0x9000, scoped, tag = 'internal scratch']
  #allocation2 [shape = 'f32[16,1]{1,0:T(8,128)}', space=vmem, size = 0x2000, scoped, tag = 'scratch operand']
  #allocation3 [shape = 'f32[16,1]{1,0:T(8,128)}', space=vmem, size = 0x2000, scoped, tag = 'scratch operand']
  #allocation4 [shape = 'f32[16,1]{1,0:T(8,128)}', space=vmem, size = 0x2000, scoped, tag = 'scratch operand']
  #allocation5 [shape = 'f32[16,1]{1,0:T(8,128)}', space=vmem, size = 0x2000, scoped, tag = 'scratch operand']
  %s0 = inlined_call_operand.hbm [shape: f32[24,256], index: 0, kind: input, shape index: {}]
  %s1 = inlined_call_operand.hbm [shape: f32[24,256], index: 1, kind: input, shape index: {}]
  %s2 = inlined_call_operand.hbm [shape: f32[1,256], index: 2, kind: input, shape index: {}]
  %s3 = inlined_call_operand.vmem [shape: f32[32,1], index: 3, kind: output, shape index: {}]
  %s4 = sld [smem:[#allocation0]]
  $region65: #{tpu_custom_call.1} parent=0
    _
  %s6 = ssub.s32 1, %s4
  %s7 = scalar_select 0, %s6, %s4
  $region1: #{tpu_custom_call.1} parent=0
    #allocation6 [shape = 'u8[32768]{0}', space=vmem, size = 0x8000, scoped, tag = 'input window, operand 0']
    #allocation7 [shape = 's32[2]{0}', space=sflag, size = 0x8, scoped, tag = 'scoped memory for tpu_custom_call.1']
    #allocation8 [shape = 'u8[32768]{0}', space=vmem, size = 0x8000, scoped, tag = 'input window, operand 1']
    #allocation9 [shape = 's32[2]{0}', space=sflag, size = 0x8, scoped, tag = 'scoped memory for tpu_custom_call.1']
    #allocation10 [shape = 'u8[1024]{0}', space=vmem, size = 0x400, scoped, tag = 'input window, operand 2, single buffered']
    %8 = vsyncpa [#allocation7], 0
    %s9 = scalar_lea.sflag [#allocation7], 1
    %10 = vsyncpa %s9, 0
    %11 = vsyncpa [#allocation9], 0
    %s12 = scalar_lea.sflag [#allocation9], 1
    %13 = vsyncpa %s12, 0
    loop: start=0, step=1, limit=4
    $region2: #{tpu_custom_call.1} parent=1 // loop_pre_header
      _
    $region3: #{tpu_custom_call.1} parent=1 // loop_header
      %s15 = sphi 0, %s19
      %p16 = scmp.ge.s32.totalorder %s15, 4
      %s22 = sphi 0, %s34
      %s23 = sphi 0, %s30
      %s24 = sphi 0, %s22
      %s25 = sphi 0, %s23
      %s26 = sphi 0, %s24
      %s27 = sphi 0, %s25
      %s39 = sphi 0, %s41
      %s42 = sphi 0, %s39
      %s43 = sphi 0, %s42
      %s59 = sphi 0, %s43
      %s67 = sphi 0, %s69
      %s70 = sphi 0, %s67
      %s71 = sphi 0, %s70
      %s87 = sphi 0, %s71
      %s93 = sphi 0, %s95
      %s96 = sphi 0, %s93
      %s97 = sphi 0, %s96
      %s113 = sphi 0, %s97
      %s119 = sphi 0, %s121
      %s122 = sphi 0, %s119
      %s123 = sphi 0, %s122
      %s139 = sphi 0, %s123
    $region4: #{tpu_custom_call.1} parent=1 // loop_header_branch
      %18 = sbr.rel (%p16) target = $region8
    $region5: #{tpu_custom_call.1} parent=1 // loop_body
      %s20 = ssub.s32 %s15, 1
      %s21 = ssub.s32 %s15, 2
      %s28 = sadd.s32 1, %s23
      %p29 = scmp.ge.s32.totalorder %s28, 1
      %s30 = scalar_select %p29, 0, %s28
      %s31 = sadd.s32 1, %s22
      %s32 = scalar_select %p29, %s31, %s22
      %p33 = scmp.ge.s32.totalorder %s32, 2
      %s34 = scalar_select %p33, 0, %s32
      %s35 = ssub.s32 %s22, %s34
      %s36 = ssub.s32 %s23, %s30
      %s37 = sor.u32 %s35, %s36
      %p38 = scmp.eq.s32.totalorder %s37, 0
      %s40 = sadd.s32 %s39, 1
      %s41 = scalar_select %p38, %s39, %s40
      %p44 = pneg %p38
      %p45 = scmp.eq.s32.totalorder %s15, 1
      %p46 = por %p44, %p45
      %p47 = scmp.ne.s32.totalorder %s39, %s42
      %p48 = scmp.eq.s32.totalorder %s15, 0
      %p49 = por %p47, %p48
      %p50 = scmp.ne.s32.totalorder %s39, %s42
      %p51 = scmp.eq.s32.totalorder %s20, 1
      %p52 = por %p50, %p51
      %p53 = scmp.ne.s32.totalorder %s42, %s43
      %p54 = scmp.eq.s32.totalorder %s20, 0
      %p55 = por %p53, %p54
      %p56 = scmp.ne.s32.totalorder %s42, %s43
      %p57 = scmp.eq.s32.totalorder %s21, 1
      %p58 = por %p56, %p57
      %p60 = scmp.ne.s32.totalorder %s43, %s59
      %p61 = scmp.eq.s32.totalorder %s21, 0
      %p62 = por %p60, %p61
      %s63 = ssub.s32 %s22, %s34
      %s64 = ssub.s32 %s23, %s30
      %s65 = sor.u32 %s63, %s64
      %p66 = scmp.eq.s32.totalorder %s65, 0
      %s68 = sadd.s32 %s67, 1
      %s69 = scalar_select %p66, %s67, %s68
      %p72 = pneg %p66
      %p73 = scmp.eq.s32.totalorder %s15, 1
      %p74 = por %p72, %p73
      %p75 = scmp.ne.s32.totalorder %s67, %s70
      %p76 = scmp.eq.s32.totalorder %s15, 0
      %p77 = por %p75, %p76
      %p78 = scmp.ne.s32.totalorder %s67, %s70
      %p79 = scmp.eq.s32.totalorder %s20, 1
      %p80 = por %p78, %p79
      %p81 = scmp.ne.s32.totalorder %s70, %s71
      %p82 = scmp.eq.s32.totalorder %s20, 0
      %p83 = por %p81, %p82
      %p84 = scmp.ne.s32.totalorder %s70, %s71
      %p85 = scmp.eq.s32.totalorder %s21, 1
      %p86 = por %p84, %p85
      %p88 = scmp.ne.s32.totalorder %s71, %s87
      %p89 = scmp.eq.s32.totalorder %s21, 0
      %p90 = por %p88, %p89
      %s91 = ssub.s32 %s23, %s30
      %p92 = scmp.eq.s32.totalorder %s91, 0
      %s94 = sadd.s32 %s93, 1
      %s95 = scalar_select %p92, %s93, %s94
      %p98 = pneg %p92
      %p99 = scmp.eq.s32.totalorder %s15, 1
      %p100 = por %p98, %p99
      %p101 = scmp.ne.s32.totalorder %s93, %s96
      %p102 = scmp.eq.s32.totalorder %s15, 0
      %p103 = por %p101, %p102
      %p104 = scmp.ne.s32.totalorder %s93, %s96
      %p105 = scmp.eq.s32.totalorder %s20, 1
      %p106 = por %p104, %p105
      %p107 = scmp.ne.s32.totalorder %s96, %s97
      %p108 = scmp.eq.s32.totalorder %s20, 0
      %p109 = por %p107, %p108
      %p110 = scmp.ne.s32.totalorder %s96, %s97
      %p111 = scmp.eq.s32.totalorder %s21, 1
      %p112 = por %p110, %p111
      %p114 = scmp.ne.s32.totalorder %s97, %s113
      %p115 = scmp.eq.s32.totalorder %s21, 0
      %p116 = por %p114, %p115
      %s117 = ssub.s32 %s22, %s34
      %p118 = scmp.eq.s32.totalorder %s117, 0
      %s120 = sadd.s32 %s119, 1
      %s121 = scalar_select %p118, %s119, %s120
      %p124 = pneg %p118
      %p125 = scmp.eq.s32.totalorder %s15, 1
      %p126 = por %p124, %p125
      %p127 = scmp.ne.s32.totalorder %s119, %s122
      %p128 = scmp.eq.s32.totalorder %s15, 0
      %p129 = por %p127, %p128
      %p130 = scmp.ne.s32.totalorder %s119, %s122
      %p131 = scmp.eq.s32.totalorder %s20, 1
      %p132 = por %p130, %p131
      %p133 = scmp.ne.s32.totalorder %s122, %s123
      %p134 = scmp.eq.s32.totalorder %s20, 0
      %p135 = por %p133, %p134
      %p136 = scmp.ne.s32.totalorder %s122, %s123
      %p137 = scmp.eq.s32.totalorder %s21, 1
      %p138 = por %p136, %p137
      %p140 = scmp.ne.s32.totalorder %s123, %s139
      %p141 = scmp.eq.s32.totalorder %s21, 0
      %p142 = por %p140, %p141
      %p143 = scmp.le.s32.totalorder 1, %s15
      %p144 = scmp.lt.s32.totalorder %s15, 3
      %p145 = pnand %p143, %p144
      %p146 = pneg %p145
      // Predicated region
      $region9: #{tpu_custom_call.1} parent=5 // pred_check
        _
      $region10: #{tpu_custom_call.1} parent=5 // pred_check_branch
        %148 = sbr.rel (%p145) target = $region12
      $region11: #{tpu_custom_call.1} parent=5 // pred_region
        %s149 = ssub.s32 %s15, 1
        // Predicated region
        $region13: #{tpu_custom_call.1} parent=11 // pred_check
          %p150 = pneg %p109
        $region14: #{tpu_custom_call.1} parent=11 // pred_check_branch
          %152 = sbr.rel (%p150) target = $region16
        $region15: #{tpu_custom_call.1} parent=11 // pred_region
          %s153 = smul.u32 2, %s25
          %155 = vsyncadd [#allocation9], 0
          %s156 = scalar_lea.hbm %s2, %s153
          %s158 = sshll.u32 %s156, 4
          %s159 = int_to_ptr.hbm [resolvable:$true] %s158
          %s160 = sshll.u32 [#allocation10], 4
          %s161 = int_to_ptr.vmem [resolvable:$true] %s160
          %163 = dma.hbm_to_vmem [thread:$0]  %s159, 32, %s161, [#allocation9]
        $region16: #{tpu_custom_call.1} parent=11 // pred_fallthru
          _
      $region12: #{tpu_custom_call.1} parent=5 // pred_fallthru
        _
      %p164 = scmp.lt.s32.totalorder %s15, 2
      // Predicated region
      $region17: #{tpu_custom_call.1} parent=5 // pred_check
        %p165 = pneg %p164
      $region18: #{tpu_custom_call.1} parent=5 // pred_check_branch
        %167 = sbr.rel (%p165) target = $region20
      $region19: #{tpu_custom_call.1} parent=5 // pred_region
        // Predicated region
        $region21: #{tpu_custom_call.1} parent=19 // pred_check
          %p168 = pneg %p49
        $region22: #{tpu_custom_call.1} parent=19 // pred_check_branch
          %170 = sbr.rel (%p168) target = $region24
        $region23: #{tpu_custom_call.1} parent=19 // pred_region
          %s171 = sand.u32 %s39, 1
          %s172 = scalar_lea.sflag [#allocation7], %s171
          %s173 = sand.u32 %s39, 1
          %s174 = smul.addr %s173, 32
          %s175 = scalar_lea.vmem [#allocation6], %s174
          %s176 = smul.u32 2, %s22
          %s177 = smul.u32 2, %s23
          %s178 = ssub.s32 3, %s176
          %p179 = scmp.lt.s32.totalorder %s178, 2
          %s180 = scalar_select %p179, %s178, 2
          %s181 = smul.u32 8, %s180
          %s182 = smul.u32 %s181, 2
          %s183 = ssub.s32 32, %s182
          %s184 = sshll.u32 %s183, 4
          %185 = vsyncadd %s172, %s184
          %p186 = scmp.ne.s32.totalorder 0, %s182
          %s187 = smul.addr %s176, 2
          %s188 = sadd.s32 %s177, %s187
          %s189 = smul.addr %s188, 8
          %s190 = scalar_lea.hbm %s0, %s189
          %s191 = smul.u32 16, %s180
          %s192 = sshll.u32 %s190, 4
          %s193 = int_to_ptr.hbm [resolvable:$true] %s192
          %s194 = sshll.u32 %s175, 4
          %s195 = int_to_ptr.vmem [resolvable:$true] %s194
          %s196 = sshll.u32 %s191, 4
          %200 = dma.hbm_to_vmem [thread:$0]  (%p186), %s193, %s196, %s195, %s172, 256, 256, 16
        $region24: #{tpu_custom_call.1} parent=19 // pred_fallthru
          _
        // Predicated region
        $region25: #{tpu_custom_call.1} parent=19 // pred_check
          %p201 = pneg %p77
        $region26: #{tpu_custom_call.1} parent=19 // pred_check_branch
          %203 = sbr.rel (%p201) target = $region28
        $region27: #{tpu_custom_call.1} parent=19 // pred_region
          %s204 = sand.u32 %s15, 1
          %s205 = scalar_lea.sflag [#allocation9], %s204
          %s206 = sand.u32 %s67, 1
          %s207 = smul.addr %s206, 32
          %s208 = scalar_lea.vmem [#allocation8], %s207
          %s209 = smul.u32 2, %s22
          %s210 = smul.u32 2, %s23
          %s211 = ssub.s32 3, %s209
          %p212 = scmp.lt.s32.totalorder %s211, 2
          %s213 = scalar_select %p212, %s211, 2
          %s214 = smul.u32 8, %s213
          %s215 = smul.u32 %s214, 2
          %s216 = ssub.s32 32, %s215
          %s217 = sshll.u32 %s216, 4
          %218 = vsyncadd %s205, %s217
          %p219 = scmp.ne.s32.totalorder 0, %s215
          %s220 = smul.addr %s209, 2
          %s221 = sadd.s32 %s210, %s220
          %s222 = smul.addr %s221, 8
          %s223 = scalar_lea.hbm %s1, %s222
          %s224 = smul.u32 16, %s213
          %s225 = sshll.u32 %s223, 4
          %s226 = int_to_ptr.hbm [resolvable:$true] %s225
          %s227 = sshll.u32 %s208, 4
          %s228 = int_to_ptr.vmem [resolvable:$true] %s227
          %s229 = sshll.u32 %s224, 4
          %233 = dma.hbm_to_vmem [thread:$0]  (%p219), %s226, %s229, %s228, %s205, 256, 256, 16
        $region28: #{tpu_custom_call.1} parent=19 // pred_fallthru
          _
      $region20: #{tpu_custom_call.1} parent=5 // pred_fallthru
        _
      %p234 = scmp.le.s32.totalorder 1, %s15
      %p235 = scmp.lt.s32.totalorder %s15, 3
      %p236 = pnand %p234, %p235
      %p237 = pneg %p236
      // Predicated region
      $region29: #{tpu_custom_call.1} parent=5 // pred_check
        _
      $region30: #{tpu_custom_call.1} parent=5 // pred_check_branch
        %239 = sbr.rel (%p236) target = $region32
      $region31: #{tpu_custom_call.1} parent=5 // pred_region
        %s240 = ssub.s32 %s15, 1
        %s241 = sand.u32 %s42, 1
        %s242 = scalar_lea.sflag [#allocation7], %s241
        %s243 = sand.u32 %s42, 1
        %s244 = smul.addr %s243, 32
        %s245 = scalar_lea.vmem [#allocation6], %s244
        // Predicated region
        $region33: #{tpu_custom_call.1} parent=31 // pred_check
          %p246 = pneg %p55
        $region34: #{tpu_custom_call.1} parent=31 // pred_check_branch
          %248 = sbr.rel (%p246) target = $region36
        $region35: #{tpu_custom_call.1} parent=31 // pred_region
          %250 = dma.done %s242, 512
        $region36: #{tpu_custom_call.1} parent=31 // pred_fallthru
          _
        %s251 = sand.u32 %s20, 1
        %s252 = scalar_lea.sflag [#allocation9], %s251
        %s253 = sand.u32 %s70, 1
        %s254 = smul.addr %s253, 32
        %s255 = scalar_lea.vmem [#allocation8], %s254
        // Predicated region
        $region37: #{tpu_custom_call.1} parent=31 // pred_check
          %p256 = pneg %p83
        $region38: #{tpu_custom_call.1} parent=31 // pred_check_branch
          %258 = sbr.rel (%p256) target = $region40
        $region39: #{tpu_custom_call.1} parent=31 // pred_region
          %260 = dma.done %s252, 512
        $region40: #{tpu_custom_call.1} parent=31 // pred_fallthru
          _
        // Predicated region
        $region41: #{tpu_custom_call.1} parent=31 // pred_check
          %p261 = pneg %p109
        $region42: #{tpu_custom_call.1} parent=31 // pred_check_branch
          %263 = sbr.rel (%p261) target = $region44
        $region43: #{tpu_custom_call.1} parent=31 // pred_region
          %265 = dma.done [#allocation9], 32
        $region44: #{tpu_custom_call.1} parent=31 // pred_fallthru
          _
        %s266 = sand.u32 %s42, 1
        %s267 = scalar_lea.sflag [#allocation7], %s266
        %s268 = sand.u32 %s42, 1
        %s269 = smul.addr %s268, 32
        %s270 = scalar_lea.vmem [#allocation6], %s269
        %p271 = pneg %p55
        %p272 = pneg %p52
        %s273 = sand.u32 %s20, 1
        %s274 = scalar_lea.sflag [#allocation9], %s273
        %s275 = sand.u32 %s70, 1
        %s276 = smul.addr %s275, 32
        %s277 = scalar_lea.vmem [#allocation8], %s276
        %p278 = pneg %p83
        %p279 = pneg %p80
        %p280 = pneg %p109
        %p281 = pneg %p106
        %p282 = pneg %p135
        %p283 = pneg %p132
        %s284 = smul.u32 2, %s24
        %p285 = scmp.lt.s32.totalorder %s284, 3
        %s286 = scalar_select %p285, %s284, 3
        %s287 = smul.addr %s286, 8
        %s288 = scalar_lea.vmem %s3, %s287
        %s289 = smul.u32 2, %s24
        %s290 = smul.u32 2, %s25
        %s291 = ssub.s32 3, %s289
        %p292 = scmp.lt.s32.totalorder %s291, 2
        %s293 = scalar_select %p292, %s291, 2
        %s294 = smul.u32 8, %s293
        %s295 = smul.u32 %s294, 2
        %s296 = smul.u32 2, %s24
        %s297 = smul.u32 2, %s25
        %s298 = ssub.s32 3, %s296
        %p299 = scmp.lt.s32.totalorder %s298, 2
        %s300 = scalar_select %p299, %s298, 2
        %s301 = smul.u32 8, %s300
        %s302 = smul.u32 %s301, 2
        %s303 = smul.u32 2, %s25
        %s304 = smul.u32 2, %s24
        %p305 = scmp.lt.s32.totalorder %s304, 3
        %s306 = scalar_select %p305, %s304, 3
        %s307 = smul.addr %s306, 8
        %s308 = scalar_lea.vmem %s3, %s307
        %s309 = smul.u32 2, %s24
        %p310 = scmp.eq.s32.totalorder %s25, 0
        // Predicated region
        $region45: #{tpu_custom_call.1} parent=31 // pred_check
          %p311 = pneg %p310
        $region46: #{tpu_custom_call.1} parent=31 // pred_check_branch
          %313 = sbr.rel (%p311) target = $region48
        $region47: #{tpu_custom_call.1} parent=31 // pred_region
          %vm314 = vcmask 7168
          %315 = vst.msk [vmem:[#allocation2] sm:$0xff] %vm314, -inf
          %316 = vst.msk [vmem:[#allocation2 + $0x8] sm:$0xff] %vm314, -inf
          %317 = vst.msk [vmem:[#allocation3] sm:$0xff] %vm314, 0.0
          %318 = vst.msk [vmem:[#allocation3 + $0x8] sm:$0xff] %vm314, 0.0
          %319 = vst.msk [vmem:[#allocation4] sm:$0xff] %vm314, 0.0
          %320 = vst.msk [vmem:[#allocation4 + $0x8] sm:$0xff] %vm314, 0.0
          %321 = vst.msk [vmem:[#allocation5] sm:$0xff] %vm314, 0.0
          %322 = vst.msk [vmem:[#allocation5 + $0x8] sm:$0xff] %vm314, 0.0
        $region48: #{tpu_custom_call.1} parent=31 // pred_fallthru
          _
        %v323 = vld [vmem:[%s245] sm:$0xff]
        %v324 = vld [vmem:[%s245 + $0x8] sm:$0xff]
        %v325 = vld [vmem:[%s245 + $0x10] sm:$0xff]
        %v326 = vld [vmem:[%s245 + $0x18] sm:$0xff]
        %v327 = vld [vmem:[#allocation10] sm:$0x3]
        %v328 = vld [vmem:[#allocation2] sm:$0xff]
        %v329 = vld [vmem:[#allocation2 + $0x8] sm:$0xff]
        %v330 = vmax.f32 %v323, %v324
        %331 = vmax.xlane.f32.xlu0 %v330
        %v332 = vpop.xlane.xlu0 %331
        %v333 = vmax.f32 %v325, %v326
        %334 = vmax.xlane.f32.xlu0 %v333
        %v335 = vpop.xlane.xlu0 %334
        %v336 = vmax.f32 %v328, %v332
        %v337 = vmax.f32 %v329, %v335
        %v338 = vld [vmem:[#allocation3] sm:$0xff]
        %v339 = vld [vmem:[#allocation3 + $0x8] sm:$0xff]
        %v340 = vsub.f32 %v328, %v336
        %v341 = vsub.f32 %v329, %v337
        %v342 = vmul.f32 %v340, 1.442695
        %v343 = vpow.pop %v342
        %v344 = vmul.f32 %v341, 1.442695
        %v345 = vpow.pop %v344
        %v346 = vmul.f32 %v338, %v343
        %v347 = vmul.f32 %v339, %v345
        %349 = vset.pattern.permute.xlu0 0
        %350 = vperm.xlu0 %349, %v336
        %v351 = vpop.permute.xlu0 %350
        %354 = vset.pattern.permute.xlu0 0
        %355 = vperm.xlu0 %354, %v337
        %v356 = vpop.permute.xlu0 %355
        %v358 = vsub.f32 %v323, %v351
        %v359 = vsub.f32 %v324, %v351
        %v360 = vsub.f32 %v325, %v356
        %v361 = vsub.f32 %v326, %v356
        %v362 = vmul.f32 %v358, 1.442695
        %v363 = vpow.pop %v362
        %v364 = vmul.f32 %v359, 1.442695
        %v365 = vpow.pop %v364
        %v366 = vmul.f32 %v360, 1.442695
        %v367 = vpow.pop %v366
        %v368 = vmul.f32 %v361, 1.442695
        %v369 = vpow.pop %v368
        %v370 = vadd.f32 %v363, %v365
        %371 = vadd.xlane.f32.xlu0 %v370
        %v372 = vpop.xlane.xlu0 %371
        %v373 = vadd.f32 %v367, %v369
        %374 = vadd.xlane.f32.xlu0 %v373
        %v375 = vpop.xlane.xlu0 %374
        %v376 = vadd.f32 %v346, %v372
        %v377 = vadd.f32 %v347, %v375
        %vm378 = vcmask 7168
        %379 = vst.msk [vmem:[#allocation3] sm:$0xff] %vm378, %v376
        %380 = vst.msk [vmem:[#allocation3 + $0x8] sm:$0xff] %vm378, %v377
        %381 = vst.msk [vmem:[#allocation2] sm:$0xff] %vm378, %v336
        %382 = vst.msk [vmem:[#allocation2 + $0x8] sm:$0xff] %vm378, %v337
        %v383 = vld [vmem:[%s255] sm:$0xff]
        %v384 = vld [vmem:[%s255 + $0x8] sm:$0xff]
        %v385 = vld [vmem:[%s255 + $0x10] sm:$0xff]
        %v386 = vld [vmem:[%s255 + $0x18] sm:$0xff]
        %v387 = vsub.f32 1.0, %v327
        %v389 = vperm.slane %v387, 0
        %v390 = vperm.slane %v387, 1
        %v393 = vmul.f32 %v389, %v383
        %v394 = vmul.f32 %v390, %v384
        %v395 = vmul.f32 %v389, %v385
        %v396 = vmul.f32 %v390, %v386
        %v397 = vmul.f32 %v327, 0.003921569
        %v399 = vperm.slane %v397, 0
        %v400 = vperm.slane %v397, 1
        %v403 = vadd.f32 %v393, %v399
        %v404 = vadd.f32 %v394, %v400
        %v405 = vadd.f32 %v395, %v399
        %v406 = vadd.f32 %v396, %v400
        %v407 = vld [vmem:[#allocation4] sm:$0xff]
        %v408 = vld [vmem:[#allocation4 + $0x8] sm:$0xff]
        %v409 = vadd.f32 %v403, %v404
        %410 = vadd.xlane.f32.xlu0 %v409
        %v411 = vpop.xlane.xlu0 %410
        %v412 = vadd.f32 %v405, %v406
        %413 = vadd.xlane.f32.xlu0 %v412
        %v414 = vpop.xlane.xlu0 %413
        %v415 = vadd.f32 %v407, %v411
        %v416 = vadd.f32 %v408, %v414
        %417 = vst.msk [vmem:[#allocation4] sm:$0xff] %vm378, %v415
        %418 = vst.msk [vmem:[#allocation4 + $0x8] sm:$0xff] %vm378, %v416
        %v419 = vld [vmem:[#allocation5] sm:$0xff]
        %v420 = vld [vmem:[#allocation5 + $0x8] sm:$0xff]
        %v421 = vmul.f32 %v403, %v323
        %v422 = vmul.f32 %v404, %v324
        %v423 = vmul.f32 %v405, %v325
        %v424 = vmul.f32 %v406, %v326
        %v425 = vadd.f32 %v421, %v422
        %426 = vadd.xlane.f32.xlu0 %v425
        %v427 = vpop.xlane.xlu0 %426
        %v428 = vadd.f32 %v423, %v424
        %429 = vadd.xlane.f32.xlu0 %v428
        %v430 = vpop.xlane.xlu0 %429
        %v431 = vadd.f32 %v419, %v427
        %v432 = vadd.f32 %v420, %v430
        %433 = vst.msk [vmem:[#allocation5] sm:$0xff] %vm378, %v431
        %434 = vst.msk [vmem:[#allocation5 + $0x8] sm:$0xff] %vm378, %v432
        // Predicated region
        $region49: #{tpu_custom_call.1} parent=31 // pred_check
          %p435 = pneg %p310
        $region50: #{tpu_custom_call.1} parent=31 // pred_check_branch
          %437 = sbr.rel (%p435) target = $region52
        $region51: #{tpu_custom_call.1} parent=31 // pred_region
          %v438 = vld [vmem:[#allocation2] sm:$0xff]
          %v439 = vld [vmem:[#allocation2 + $0x8] sm:$0xff]
          %v440 = vld [vmem:[#allocation3] sm:$0xff]
          %v441 = vld [vmem:[#allocation3 + $0x8] sm:$0xff]
          %v442 = vlog2.pop %v440
          %v443 = vmul.f32 %v442, 0.6931472
          %v444 = vlog2.pop %v441
          %v445 = vmul.f32 %v444, 0.6931472
          %v446 = vadd.f32 %v438, %v443
          %v447 = vadd.f32 %v439, %v445
          %v448 = vld [vmem:[#allocation4] sm:$0xff]
          %v449 = vld [vmem:[#allocation4 + $0x8] sm:$0xff]
          %v450 = vmul.f32 %v446, %v448
          %v451 = vmul.f32 %v447, %v449
          %v452 = vld [vmem:[#allocation5] sm:$0xff]
          %v453 = vld [vmem:[#allocation5 + $0x8] sm:$0xff]
          %v454 = vsub.f32 %v450, %v452
          %v455 = vsub.f32 %v451, %v453
          %s456 = smul.u32 %s24, 16
          %v457 = vlaneseq
          %v458 = vshrl.u32 %v457, 7
          %v459 = vadd.s32 %v458, 8
          %v460 = vstv %s456
          %v461 = vadd.s32 %v460, %v458
          %v462 = vadd.s32 %v460, %v459
          %vm463 = vcmp.lt.s32.totalorder %v461, 24
          %vm464 = vcmp.lt.s32.totalorder %v462, 24
          %v465 = vsel %vm463, %v454, 0.0
          %v466 = vsel %vm464, %v455, 0.0
          %467 = vst.msk [vmem:[%s308] sm:$0xff] %vm378, %v465
          %468 = vst.msk [vmem:[%s308 + $0x8] sm:$0xff] %vm378, %v466
        $region52: #{tpu_custom_call.1} parent=31 // pred_fallthru
          _
        %s469 = smul.u32 2, %s24
        %p470 = scmp.lt.s32.totalorder %s469, 3
        %s471 = scalar_select %p470, %s469, 3
        %s472 = smul.addr %s471, 8
        %s473 = scalar_lea.vmem %s3, %s472
        // Predicated region
        $region53: #{tpu_custom_call.1} parent=31 // pred_check
          %p474 = pneg %p132
        $region54: #{tpu_custom_call.1} parent=31 // pred_check_branch
          %476 = sbr.rel (%p474) target = $region56
        $region55: #{tpu_custom_call.1} parent=31 // pred_region
          %s477 = smul.u32 2, %s24
        $region56: #{tpu_custom_call.1} parent=31 // pred_fallthru
          _
      $region32: #{tpu_custom_call.1} parent=5 // pred_fallthru
        _
      %p478 = scmp.le.s32.totalorder 2, %s15
      // Predicated region
      $region57: #{tpu_custom_call.1} parent=5 // pred_check
        %p479 = pneg %p478
      $region58: #{tpu_custom_call.1} parent=5 // pred_check_branch
        %481 = sbr.rel (%p479) target = $region60
      $region59: #{tpu_custom_call.1} parent=5 // pred_region
        %s482 = ssub.s32 %s15, 2
        // Predicated region
        $region61: #{tpu_custom_call.1} parent=59 // pred_check
          %p483 = pneg %p138
        $region62: #{tpu_custom_call.1} parent=59 // pred_check_branch
          %485 = sbr.rel (%p483) target = $region64
        $region63: #{tpu_custom_call.1} parent=59 // pred_region
          %s486 = smul.u32 2, %s26
          %p487 = scmp.lt.s32.totalorder %s486, 3
          %s488 = scalar_select %p487, %s486, 3
          %s489 = smul.addr %s488, 8
          %s490 = scalar_lea.vmem %s3, %s489
        $region64: #{tpu_custom_call.1} parent=59 // pred_fallthru
          _
      $region60: #{tpu_custom_call.1} parent=5 // pred_fallthru
        _
    $region6: #{tpu_custom_call.1} parent=1 // loop_footer
      %s19 = sadd.s32 1, %s15
    $region7: #{tpu_custom_call.1} parent=1 // loop_footer_branch
      %14 = sbr.rel target = $region3
    $region8: #{tpu_custom_call.1} parent=1 // loop_exit
      _
    %491 = vsyncpa [#allocation7], 1
    %s492 = scalar_lea.sflag [#allocation7], 1
    %493 = vsyncpa %s492, 1
    %494 = vsyncpa [#allocation9], 1
    %s495 = scalar_lea.sflag [#allocation9], 1
    %496 = vsyncpa %s495, 1

</llo_original>
